<compile_context>
chip_gen: v6e
topology: v6e:2x2x1
jax: 0.10.0
libtpu: 0.0.40
codegen_flags: <defaults>
</compile_context>

<pallas_src>
import functools
import math

import jax
import jax.numpy as jnp
from jax.experimental import pallas as pl
from jax.experimental.pallas import tpu as pltpu

LN_EPS = 1e-12
NEG_INF = -1e9          # additive attention-mask value (HF uses dtype-min)
# Evaluate transcendentals (softmax exp, GELU tanh) in bf16 (~2x EUP rate on
# v6e/v7x).  Set False on v5e (no bf16 EUP) or for tighter numerics.
TRANSCENDENTAL_BF16 = True


def _vmem_budget_bytes():
  """Generation-aware scoped-VMEM budget (v5e/v6e: 128 MiB phys, v7x: 64 MiB)."""
  cap = 64 << 20
  try:
    info = pltpu.get_tpu_info()
    cap = int(getattr(info, "vmem_capacity_bytes", cap))
  except Exception:
    pass
  return min(int(cap * 0.6), 96 << 20)


VMEM_LIMIT = _vmem_budget_bytes()
ROW_TILE_TARGET = 512 if VMEM_LIMIT >= (64 << 20) else 256


def _round_up(x, m):
  return ((x + m - 1) // m) * m


def _row_tiling(m):
  """Return (row_tile, padded_rows); tile is a multiple of 8, never one huge block."""
  m8 = _round_up(m, 8)
  if m8 <= ROW_TILE_TARGET:
    return m8, m8
  for tm in (ROW_TILE_TARGET, ROW_TILE_TARGET // 2, 128, 64, 32, 16, 8):
    if m8 % tm == 0:
      return tm, m8
  return ROW_TILE_TARGET, _round_up(m8, ROW_TILE_TARGET)   # unreachable fallback


def _pad_rows(x, m_pad):
  m = x.shape[0]
  return x if m_pad == m else jnp.pad(x, ((0, m_pad - m), (0, 0)))


def _compiler_params(semantics):
  return pltpu.CompilerParams(dimension_semantics=semantics,
                              vmem_limit_bytes=VMEM_LIMIT)


# ------------------------------------------------------------------ in-kernel helpers

def _layernorm(h, gamma, beta, eps):
  mu = jnp.mean(h, axis=-1, keepdims=True)
  var = jnp.mean(jnp.square(h - mu), axis=-1, keepdims=True)
  return (h - mu) * jax.lax.rsqrt(var + eps) * gamma + beta


def _gelu_tanh(y):
  # TODO(synk): HF default 'gelu' is erf-based; tanh approximation used here.
  arg = 0.7978845608028654 * (y + 0.044715 * y * y * y)
  if TRANSCENDENTAL_BF16:
    t = jnp.tanh(arg.astype(jnp.bfloat16)).astype(jnp.float32)
  else:
    t = jnp.tanh(arg)
  return 0.5 * y * (1.0 + t)


def _softmax_rows(s):
  mx = jnp.max(s, axis=-1, keepdims=True)
  e = s - mx
  if TRANSCENDENTAL_BF16:
    p = jnp.exp(e.astype(jnp.bfloat16)).astype(jnp.float32)
  else:
    p = jnp.exp(e)
  return p * pl.reciprocal(jnp.sum(p, axis=-1, keepdims=True), approx=True)


# ---------------------------------------------------------------------------- kernels

def _embed_ln_kernel(word_ref, tt_ref, spk_ref, pos_ref, itt_ref, gam_ref, bet_ref,
                     o_ref, *, with_spk, eps):
  # outer module: word + token_type + position (+ speaker)
  h = word_ref[0] + tt_ref[0] + pos_ref[...]
  if with_spk:
    h = h + spk_ref[0]
  # inner HF BertEmbeddings (inputs_embeds path): adds position embeddings and
  # token_type embeddings for token_type_ids=0 again, then LayerNorm.
  h = h + pos_ref[...] + itt_ref[...]
  o_ref[0] = _layernorm(h, gam_ref[...], bet_ref[...], eps)


def _attn_block_kernel(x_ref, wqkv_ref, bqkv_ref, wo_ref, bo_ref, m_ref,
                       gam_ref, bet_ref, o_ref, acc_ref, *, head_dim, eps):
  # Grid = (B, n_heads): one head per step; output projection accumulated over
  # heads in a VMEM scratch; residual + LayerNorm fused at the last head.
  # TODO(synk): for S >= ~1024 also tile the query axis (flash-style softmax).
  hd = pl.program_id(1)

  @pl.when(hd == 0)
  def _():
    acc_ref[...] = jnp.zeros_like(acc_ref)

  d = head_dim
  x_f32 = x_ref[0]                                      # (S, H) residual stream, f32
  x = x_f32.astype(wqkv_ref.dtype)                      # bf16 MXU input
  qkv = jnp.dot(x, wqkv_ref[0],
                preferred_element_type=jnp.float32) + bqkv_ref[0]   # (S, 3D) f32
  q = qkv[:, :d].astype(jnp.bfloat16)                   # 1/sqrt(D) folded into Wq
  k = qkv[:, d:2 * d].astype(jnp.bfloat16)
  v = qkv[:, 2 * d:].astype(jnp.bfloat16)

  s = jnp.einsum("qd,kd->qk", q, k, preferred_element_type=jnp.float32)  # (S, S)
  s = s + m_ref[0]                                      # additive key mask (1, S)
  p = _softmax_rows(s)
  ctx = jnp.dot(p.astype(jnp.bfloat16), v, preferred_element_type=jnp.float32)

  # this head's slice of the attention output projection
  acc_ref[...] += jnp.dot(ctx.astype(jnp.bfloat16), wo_ref[0],
                          preferred_element_type=jnp.float32)        # (S, H)

  @pl.when(hd == pl.num_programs(1) - 1)
  def _():
    h = acc_ref[...] + bo_ref[...] + x_f32              # dense bias + residual
    o_ref[0] = _layernorm(h, gam_ref[...], bet_ref[...], eps)


def _ffn_kernel(x_ref, wi_ref, bi_ref, wo2_ref, bo2_ref, gam_ref, bet_ref, o_ref,
                *, eps):
  # up-proj + GELU + down-proj + residual + LayerNorm; (tm, inter) intermediate
  # never leaves VMEM.
  x_f32 = x_ref[...]
  x = x_f32.astype(wi_ref.dtype)
  y = jnp.dot(x, wi_ref[...], preferred_element_type=jnp.float32) + bi_ref[...]
  inter = _gelu_tanh(y).astype(jnp.bfloat16)
  z = jnp.dot(inter, wo2_ref[...], preferred_element_type=jnp.float32) + bo2_ref[...]
  h = z + x_f32
  o_ref[...] = _layernorm(h, gam_ref[...], bet_ref[...], eps)


def _linear_kernel(x_ref, w_ref, b_ref, o_ref, *, act):
  w = w_ref[...]
  x = x_ref[...].astype(w.dtype)
  y = jnp.dot(x, w, preferred_element_type=jnp.float32) + b_ref[...]
  if act == "tanh":
    y = jnp.tanh(y)
  o_ref[...] = y.astype(o_ref.dtype)


# --------------------------------------------------------------------------- wrappers

def fused_embed(word, tt, spk, pos, inner_tt0, gamma, beta, with_spk):
  B, S, H = word.shape
  row3 = pl.BlockSpec((1, S, H), lambda b: (b, 0, 0))
  vec = pl.BlockSpec((1, H), lambda b: (0, 0))
  return pl.pallas_call(
      functools.partial(_embed_ln_kernel, with_spk=with_spk, eps=LN_EPS),
      grid=(B,),
      in_specs=[row3, row3, row3,
                pl.BlockSpec((S, H), lambda b: (0, 0)),   # pos stays VMEM-resident
                vec, vec, vec],
      out_specs=row3,
      out_shape=jax.ShapeDtypeStruct((B, S, H), jnp.float32),
      compiler_params=_compiler_params(("parallel",)),
  )(word, tt, spk, pos, inner_tt0.reshape(1, H),
    gamma.reshape(1, H), beta.reshape(1, H))


def attention_block(x_bsh, lp, amask, n_heads, head_dim):
  B, S, H = x_bsh.shape
  d = head_dim
  return pl.pallas_call(
      functools.partial(_attn_block_kernel, head_dim=d, eps=LN_EPS),
      grid=(B, n_heads),
      in_specs=[
          pl.BlockSpec((1, S, H), lambda b, h: (b, 0, 0)),       # x (resident over h)
          pl.BlockSpec((1, H, 3 * d), lambda b, h: (h, 0, 0)),   # per-head Wqkv
          pl.BlockSpec((1, 1, 3 * d), lambda b, h: (h, 0, 0)),   # per-head bqkv
          pl.BlockSpec((1, d, H), lambda b, h: (h, 0, 0)),       # per-head Wo rows
          pl.BlockSpec((1, H), lambda b, h: (0, 0)),             # bo
          pl.BlockSpec((1, 1, S), lambda b, h: (b, 0, 0)),       # additive mask
          pl.BlockSpec((1, H), lambda b, h: (0, 0)),             # ln gamma
          pl.BlockSpec((1, H), lambda b, h: (0, 0)),             # ln beta
      ],
      out_specs=pl.BlockSpec((1, S, H), lambda b, h: (b, 0, 0)),
      out_shape=jax.ShapeDtypeStruct((B, S, H), jnp.float32),
      scratch_shapes=[pltpu.VMEM((S, H), jnp.float32)],
      compiler_params=_compiler_params(("parallel", "arbitrary")),
  )(x_bsh, lp["wqkv_h"], lp["bqkv_h"], lp["wo_h"], lp["bo"].reshape(1, H),
    amask, lp["ln1_g"].reshape(1, H), lp["ln1_b"].reshape(1, H))


def fused_ffn(x, wi, bi, wo2, bo2, gamma, beta):
  M, H = x.shape
  I = wi.shape[1]
  tm, m_pad = _row_tiling(M)
  x_p = _pad_rows(x, m_pad)
  out = pl.pallas_call(
      functools.partial(_ffn_kernel, eps=LN_EPS),
      grid=(m_pad // tm,),
      in_specs=[
          pl.BlockSpec((tm, H), lambda i: (i, 0)),
          pl.BlockSpec((H, I), lambda i: (0, 0)),     # wi VMEM-resident
          pl.BlockSpec((1, I), lambda i: (0, 0)),
          pl.BlockSpec((I, H), lambda i: (0, 0)),     # wo2 VMEM-resident
          pl.BlockSpec((1, H), lambda i: (0, 0)),
          pl.BlockSpec((1, H), lambda i: (0, 0)),
          pl.BlockSpec((1, H), lambda i: (0, 0)),
      ],
      out_specs=pl.BlockSpec((tm, H), lambda i: (i, 0)),
      out_shape=jax.ShapeDtypeStruct((m_pad, H), jnp.float32),
      compiler_params=_compiler_params(("parallel",)),
  )(x_p, wi, bi.reshape(1, I), wo2, bo2.reshape(1, H),
    gamma.reshape(1, H), beta.reshape(1, H))
  return out if m_pad == M else out[:M]


def linear(x, w, b, act=None, out_dtype=jnp.float32):
  M, K = x.shape
  N = w.shape[1]
  tm, m_pad = _row_tiling(M)
  x_p = _pad_rows(x, m_pad)
  out = pl.pallas_call(
      functools.partial(_linear_kernel, act=act),
      grid=(m_pad // tm,),
      in_specs=[
          pl.BlockSpec((tm, K), lambda i: (i, 0)),
          pl.BlockSpec((K, N), lambda i: (0, 0)),
          pl.BlockSpec((1, N), lambda i: (0, 0)),
      ],
      out_specs=pl.BlockSpec((tm, N), lambda i: (i, 0)),
      out_shape=jax.ShapeDtypeStruct((m_pad, N), out_dtype),
      compiler_params=_compiler_params(("parallel",)),
  )(x_p, w, b.reshape(1, N))
  return out if m_pad == M else out[:M]


# ------------------------------------------------------------------------------ model

def init_params(key, vocab, type_vocab, max_pos, n_spk, H, n_layers, n_heads, inter):
  D = H // n_heads
  keys = iter(jax.random.split(key, 8 + 8 * n_layers))

  def nrm(shape):
    return 0.02 * jax.random.normal(next(keys), shape, jnp.float32)

  p = dict(
      hidden=H, n_heads=n_heads,
      word_emb=nrm((vocab, H)),
      tt_emb=nrm((type_vocab, H)),
      pos_emb=nrm((max_pos, H)),
      spk_emb=nrm((n_spk, H)),
      emb_ln_g=jnp.ones((H,), jnp.float32), emb_ln_b=jnp.zeros((H,), jnp.float32),
      pool_w=nrm((H, H)).astype(jnp.bfloat16), pool_b=jnp.zeros((H,), jnp.float32),
      layers=[],
  )

  scale = 1.0 / math.sqrt(D)

  def heads_cols(w):   # (H, H) -> (n_heads, H, D): head-major output columns
    return w.reshape(H, n_heads, D).transpose(1, 0, 2)

  def heads_vec(b):    # (H,) -> (n_heads, 1, D)
    return b.reshape(n_heads, 1, D)

  for _ in range(n_layers):
    wq, wk, wv, wo = nrm((H, H)), nrm((H, H)), nrm((H, H)), nrm((H, H))
    bq = jnp.zeros((H,), jnp.float32)
    bk = jnp.zeros((H,), jnp.float32)
    bv = jnp.zeros((H,), jnp.float32)
    # parameter-prep-time repack: per-head [Wq*scale | Wk | Wv], per-head Wo rows
    wqkv_h = jnp.concatenate(
        [heads_cols(wq * scale), heads_cols(wk), heads_cols(wv)],
        axis=-1).astype(jnp.bfloat16)                                 # (nh, H, 3D)
    bqkv_h = jnp.concatenate(
        [heads_vec(bq * scale), heads_vec(bk), heads_vec(bv)], axis=-1)  # (nh, 1, 3D)
    wo_h = wo.reshape(n_heads, D, H).astype(jnp.bfloat16)             # (nh, D, H)

    p["layers"].append(dict(
        wqkv_h=wqkv_h, bqkv_h=bqkv_h, wo_h=wo_h, bo=jnp.zeros((H,), jnp.float32),
        ln1_g=jnp.ones((H,), jnp.float32), ln1_b=jnp.zeros((H,), jnp.float32),
        wi=nrm((H, inter)).astype(jnp.bfloat16), bi=jnp.zeros((inter,), jnp.float32),
        wo2=nrm((inter, H)).astype(jnp.bfloat16), bo2=jnp.zeros((H,), jnp.float32),
        ln2_g=jnp.ones((H,), jnp.float32), ln2_b=jnp.zeros((H,), jnp.float32),
    ))
  return p


def bert_with_speaker_id_forward(params, input_ids, token_type_ids, attention_mask,
                                 speaker_ids, with_spk_embedding):
  B, S = input_ids.shape
  H = params["hidden"]
  n_heads = params["n_heads"]
  head_dim = H // n_heads

  # ---- embedding gathers (plain-JAX glue) ----
  word = jnp.take(params["word_emb"], input_ids, axis=0)         # (B, S, H)
  tt = jnp.take(params["tt_emb"], token_type_ids, axis=0)        # (B, S, H)
  spk = jnp.take(params["spk_emb"], speaker_ids, axis=0)         # (B, S, H)
  pos = params["pos_emb"][:S]                                    # (S, H) — no (M,H) broadcast
  inner_tt0 = params["tt_emb"][0]                                # (H,)

  # ---- fused embedding sum + LayerNorm ----
  x = fused_embed(word, tt, spk, pos, inner_tt0,
                  params["emb_ln_g"], params["emb_ln_b"],
                  bool(with_spk_embedding))                      # (B, S, H) f32
  # TODO(synk): dropout is identity (eval mode), not modeled.

  # ---- extended additive attention mask (B, 1, S) ----
  amask = ((1.0 - attention_mask.astype(jnp.float32)) * NEG_INF).reshape(B, 1, S)

  # ---- encoder: 2 pallas_calls per layer ----
  for lp in params["layers"]:
    attn = attention_block(x, lp, amask, n_heads, head_dim)      # (B, S, H)
    h = fused_ffn(attn.reshape(B * S, H), lp["wi"], lp["bi"], lp["wo2"], lp["bo2"],
                  lp["ln2_g"], lp["ln2_b"])                      # (B*S, H)
    x = h.reshape(B, S, H)

  last_hidden = x

  # ---- pooler: tanh(hidden[:, 0] @ W + b) ----
  pooled = linear(last_hidden[:, 0, :], params["pool_w"], params["pool_b"], act="tanh")
  return last_hidden, pooled


# ------------------------------------------------------------------------------- main

if __name__ == "__main__":
  B, S, H = 2, 8, 32
  N_HEADS, N_LAYERS, INTER = 4, 2, 64
  VOCAB, TYPE_VOCAB, MAX_POS, N_SPK = 50, 2, 16, 6

  root = jax.random.PRNGKey(0)
  k_param, k_in, k_tt, k_spk = jax.random.split(root, 4)

  params = init_params(k_param, VOCAB, TYPE_VOCAB, MAX_POS, N_SPK,
                       H, N_LAYERS, N_HEADS, INTER)

  input_ids = jax.random.randint(k_in, (B, S), 0, VOCAB, dtype=jnp.int32)
  token_type_ids = jax.random.randint(k_tt, (B, S), 0, TYPE_VOCAB, dtype=jnp.int32)
  speaker_ids = jax.random.randint(k_spk, (B, S), 0, N_SPK, dtype=jnp.int32)
  attention_mask = jnp.ones((B, S), jnp.int32).at[1, S - 2:].set(0)  # pad last 2 of row 1

  last_hidden, pooled = bert_with_speaker_id_forward(
      params, input_ids, token_type_ids, attention_mask, speaker_ids,
      with_spk_embedding=True)
  jax.block_until_ready((last_hidden, pooled))

  assert last_hidden.shape == (B, S, H) and pooled.shape == (B, H)
  assert jnp.all(jnp.isfinite(last_hidden)) and jnp.all(jnp.isfinite(pooled))
  print("KERNEL_OK")
</pallas_src>

<mosaic_0001>
module attributes {stable_mosaic.version = 11 : i64} {
  func.func @_embed_ln_kernel(%arg0: i32, %arg1: memref<1x8x32xf32, #tpu.memory_space<vmem>>, %arg2: memref<1x8x32xf32, #tpu.memory_space<vmem>>, %arg3: memref<1x8x32xf32, #tpu.memory_space<vmem>>, %arg4: memref<8x32xf32, #tpu.memory_space<vmem>>, %arg5: memref<1x32xf32, #tpu.memory_space<vmem>>, %arg6: memref<1x32xf32, #tpu.memory_space<vmem>>, %arg7: memref<1x32xf32, #tpu.memory_space<vmem>>, %arg8: memref<1x8x32xf32, #tpu.memory_space<vmem>>) attributes {dimension_semantics = [#tpu.dimension_semantics<parallel>], iteration_bounds = array<i64: 2>, scalar_prefetch = 0 : i64, scratch_operands = 0 : i64, tpu.core_type = #tpu.core_type<tc>, window_params = [{transform_indices = @transform_0, window_bounds = array<i64: 1, 8, 32>}, {transform_indices = @transform_1, window_bounds = array<i64: 1, 8, 32>}, {transform_indices = @transform_2, window_bounds = array<i64: 1, 8, 32>}, {pipeline_mode = #tpu.pipeline_mode<synchronous>, transform_indices = @transform_3, window_bounds = array<i64: 8, 32>}, {pipeline_mode = #tpu.pipeline_mode<synchronous>, transform_indices = @transform_4, window_bounds = array<i64: 1, 32>}, {pipeline_mode = #tpu.pipeline_mode<synchronous>, transform_indices = @transform_5, window_bounds = array<i64: 1, 32>}, {pipeline_mode = #tpu.pipeline_mode<synchronous>, transform_indices = @transform_6, window_bounds = array<i64: 1, 32>}, {transform_indices = @transform_7, window_bounds = array<i64: 1, 8, 32>}]} {
    %c0 = arith.constant 0 : index
    %c0_0 = arith.constant 0 : index
    %c0_1 = arith.constant 0 : index
    %0 = vector.load %arg1[%c0, %c0_0, %c0_1] : memref<1x8x32xf32, #tpu.memory_space<vmem>>, vector<1x8x32xf32>
    %1 = vector.shape_cast %0 : vector<1x8x32xf32> to vector<8x32xf32>
    %c0_2 = arith.constant 0 : index
    %c0_3 = arith.constant 0 : index
    %c0_4 = arith.constant 0 : index
    %2 = vector.load %arg2[%c0_2, %c0_3, %c0_4] : memref<1x8x32xf32, #tpu.memory_space<vmem>>, vector<1x8x32xf32>
    %3 = vector.shape_cast %2 : vector<1x8x32xf32> to vector<8x32xf32>
    %4 = arith.addf %1, %3 : vector<8x32xf32>
    %c0_5 = arith.constant 0 : index
    %c0_6 = arith.constant 0 : index
    %5 = vector.load %arg4[%c0_5, %c0_6] : memref<8x32xf32, #tpu.memory_space<vmem>>, vector<8x32xf32>
    %6 = arith.addf %4, %5 : vector<8x32xf32>
    %c0_7 = arith.constant 0 : index
    %c0_8 = arith.constant 0 : index
    %c0_9 = arith.constant 0 : index
    %7 = vector.load %arg3[%c0_7, %c0_8, %c0_9] : memref<1x8x32xf32, #tpu.memory_space<vmem>>, vector<1x8x32xf32>
    %8 = vector.shape_cast %7 : vector<1x8x32xf32> to vector<8x32xf32>
    %9 = arith.addf %6, %8 : vector<8x32xf32>
    %c0_10 = arith.constant 0 : index
    %c0_11 = arith.constant 0 : index
    %10 = vector.load %arg4[%c0_10, %c0_11] : memref<8x32xf32, #tpu.memory_space<vmem>>, vector<8x32xf32>
    %11 = arith.addf %9, %10 : vector<8x32xf32>
    %c0_12 = arith.constant 0 : index
    %c0_13 = arith.constant 0 : index
    %12 = vector.load %arg5[%c0_12, %c0_13] : memref<1x32xf32, #tpu.memory_space<vmem>>, vector<1x32xf32>
    %13 = vector.broadcast %12 : vector<1x32xf32> to vector<8x32xf32>
    %14 = arith.addf %11, %13 : vector<8x32xf32>
    %c0_14 = arith.constant 0 : index
    %c0_15 = arith.constant 0 : index
    %15 = vector.load %arg6[%c0_14, %c0_15] : memref<1x32xf32, #tpu.memory_space<vmem>>, vector<1x32xf32>
    %c0_16 = arith.constant 0 : index
    %c0_17 = arith.constant 0 : index
    %16 = vector.load %arg7[%c0_16, %c0_17] : memref<1x32xf32, #tpu.memory_space<vmem>>, vector<1x32xf32>
    %cst = arith.constant dense<0.000000e+00> : vector<8xf32>
    %17 = vector.multi_reduction <add>, %14, %cst [1] : vector<8x32xf32> to vector<8xf32>
    %18 = vector.shape_cast %17 : vector<8xf32> to vector<8x1xf32>
    %cst_18 = arith.constant 3.200000e+01 : f32
    %19 = vector.broadcast %cst_18 : f32 to vector<8x1xf32>
    %20 = arith.divf %18, %19 : vector<8x1xf32>
    %21 = vector.broadcast %20 : vector<8x1xf32> to vector<8x32xf32>
    %22 = arith.subf %14, %21 : vector<8x32xf32>
    %23 = arith.mulf %22, %22 : vector<8x32xf32>
    %cst_19 = arith.constant dense<0.000000e+00> : vector<8xf32>
    %24 = vector.multi_reduction <add>, %23, %cst_19 [1] : vector<8x32xf32> to vector<8xf32>
    %25 = vector.shape_cast %24 : vector<8xf32> to vector<8x1xf32>
    %cst_20 = arith.constant 3.200000e+01 : f32
    %26 = vector.broadcast %cst_20 : f32 to vector<8x1xf32>
    %27 = arith.divf %25, %26 : vector<8x1xf32>
    %28 = vector.broadcast %20 : vector<8x1xf32> to vector<8x32xf32>
    %29 = arith.subf %14, %28 : vector<8x32xf32>
    %cst_21 = arith.constant 9.99999996E-13 : f32
    %30 = vector.broadcast %cst_21 : f32 to vector<8x1xf32>
    %31 = arith.addf %27, %30 : vector<8x1xf32>
    %32 = math.rsqrt %31 : vector<8x1xf32>
    %33 = vector.broadcast %32 : vector<8x1xf32> to vector<8x32xf32>
    %34 = arith.mulf %29, %33 : vector<8x32xf32>
    %35 = vector.broadcast %15 : vector<1x32xf32> to vector<8x32xf32>
    %36 = arith.mulf %34, %35 : vector<8x32xf32>
    %37 = vector.broadcast %16 : vector<1x32xf32> to vector<8x32xf32>
    %38 = arith.addf %36, %37 : vector<8x32xf32>
    %c0_22 = arith.constant 0 : index
    %c0_23 = arith.constant 0 : index
    %c0_24 = arith.constant 0 : index
    %39 = vector.load %arg8[%c0_22, %c0_23, %c0_24] : memref<1x8x32xf32, #tpu.memory_space<vmem>>, vector<1x8x32xf32>
    %40 = vector.shape_cast %39 : vector<1x8x32xf32> to vector<8x32xf32>
    %41 = vector.shape_cast %38 : vector<8x32xf32> to vector<1x8x32xf32>
    tpu.vector_store %arg8[%c0_22, %c0_23, %c0_24], %41 {strides = array<i32>} : memref<1x8x32xf32, #tpu.memory_space<vmem>>, vector<1x8x32xf32>,
    return
  }
  func.func @transform_0(%arg0: i32) -> (i32, i32, i32) {
    %c0_i32 = arith.constant 0 : i32
    %c0_i32_0 = arith.constant 0 : i32
    %c0_i32_1 = arith.constant 0 : i32
    return %arg0, %c0_i32, %c0_i32_0 : i32, i32, i32
  }
  func.func @transform_1(%arg0: i32) -> (i32, i32, i32) {
    %c0_i32 = arith.constant 0 : i32
    %c0_i32_0 = arith.constant 0 : i32
    %c0_i32_1 = arith.constant 0 : i32
    return %arg0, %c0_i32, %c0_i32_0 : i32, i32, i32
  }
  func.func @transform_2(%arg0: i32) -> (i32, i32, i32) {
    %c0_i32 = arith.constant 0 : i32
    %c0_i32_0 = arith.constant 0 : i32
    %c0_i32_1 = arith.constant 0 : i32
    return %arg0, %c0_i32, %c0_i32_0 : i32, i32, i32
  }
  func.func @transform_3(%arg0: i32) -> (i32, i32) {
    %c0_i32 = arith.constant 0 : i32
    %c0_i32_0 = arith.constant 0 : i32
    %c0_i32_1 = arith.constant 0 : i32
    return %c0_i32, %c0_i32_0 : i32, i32
  }
  func.func @transform_4(%arg0: i32) -> (i32, i32) {
    %c0_i32 = arith.constant 0 : i32
    %c0_i32_0 = arith.constant 0 : i32
    %c0_i32_1 = arith.constant 0 : i32
    return %c0_i32, %c0_i32_0 : i32, i32
  }
  func.func @transform_5(%arg0: i32) -> (i32, i32) {
    %c0_i32 = arith.constant 0 : i32
    %c0_i32_0 = arith.constant 0 : i32
    %c0_i32_1 = arith.constant 0 : i32
    return %c0_i32, %c0_i32_0 : i32, i32
  }
  func.func @transform_6(%arg0: i32) -> (i32, i32) {
    %c0_i32 = arith.constant 0 : i32
    %c0_i32_0 = arith.constant 0 : i32
    %c0_i32_1 = arith.constant 0 : i32
    return %c0_i32, %c0_i32_0 : i32, i32
  }
  func.func @transform_7(%arg0: i32) -> (i32, i32, i32) {
    %c0_i32 = arith.constant 0 : i32
    %c0_i32_0 = arith.constant 0 : i32
    %c0_i32_1 = arith.constant 0 : i32
    return %arg0, %c0_i32, %c0_i32_0 : i32, i32, i32
  }
}

</mosaic_0001>

<llo_original>
// kernel: tpu_custom_call.1
$region0: #{tpu_custom_call.1}
  #allocation0 [shape = 'u32[]', space=smem, size = 0x4, offset = 0x4, fixed_abs, tag = 'smem constant byte address 0x4 - core index']
  #allocation1 [shape = 'u32[144,128]{1,0:T(1,128)}', space=vmem, size = 0x12000, scoped, tag = 'internal scratch']
  %s0 = inlined_call_operand.hbm [shape: f32[2,8,32], index: 0, kind: input, shape index: {}]
  %s1 = inlined_call_operand.hbm [shape: f32[2,8,32], index: 1, kind: input, shape index: {}]
  %s2 = inlined_call_operand.hbm [shape: f32[2,8,32], index: 2, kind: input, shape index: {}]
  %s3 = inlined_call_operand.hbm [shape: f32[8,32], index: 3, kind: input, shape index: {}]
  %s4 = inlined_call_operand.vmem [shape: f32[1,32], index: 4, kind: input, shape index: {}]
  %s5 = inlined_call_operand.vmem [shape: f32[1,32], index: 5, kind: input, shape index: {}]
  %s6 = inlined_call_operand.vmem [shape: f32[1,32], index: 6, kind: input, shape index: {}]
  %s7 = inlined_call_operand.hbm [shape: f32[2,8,32], index: 7, kind: output, shape index: {}]
  %s8 = sld [smem:[#allocation0]]
  $region77: #{tpu_custom_call.1} parent=0
    _
  %s10 = ssub.s32 1, %s8
  %s11 = scalar_select 0, %s10, %s8
  $region1: #{tpu_custom_call.1} parent=0
    #allocation2 [shape = 'u8[8192]{0}', space=vmem, size = 0x2000, scoped, tag = 'input window, operand 0']
    #allocation3 [shape = 's32[2]{0}', space=sflag, size = 0x8, scoped, tag = 'scoped memory for tpu_custom_call.1']
    #allocation4 [shape = 's32[2]{0}', space=sflag, size = 0x8, scoped, tag = 'scoped memory for tpu_custom_call.1']
    #allocation5 [shape = 'u8[8192]{0}', space=vmem, size = 0x2000, scoped, tag = 'input window, operand 1']
    #allocation6 [shape = 's32[2]{0}', space=sflag, size = 0x8, scoped, tag = 'scoped memory for tpu_custom_call.1']
    #allocation7 [shape = 'u8[8192]{0}', space=vmem, size = 0x2000, scoped, tag = 'input window, operand 2']
    #allocation8 [shape = 'u8[4096]{0}', space=vmem, size = 0x1000, scoped, tag = 'input window, operand 3, single buffered']
    #allocation9 [shape = 's32[1]{0}', space=sflag, size = 0x4, scoped, tag = 'scoped memory for tpu_custom_call.1']
    #allocation10 [shape = 'u8[8192]{0}', space=vmem, size = 0x2000, scoped, tag = 'output window, operand 0']
    %12 = vsyncpa [#allocation3], 0
    %s13 = scalar_lea.sflag [#allocation3], 1
    %14 = vsyncpa %s13, 0
    %15 = vsyncpa [#allocation6], 0
    %s16 = scalar_lea.sflag [#allocation6], 1
    %17 = vsyncpa %s16, 0
    %18 = vsyncpa [#allocation9], 0
    %19 = vsyncpa [#allocation4], 0
    %s20 = scalar_lea.sflag [#allocation4], 1
    %21 = vsyncpa %s20, 0
    loop: start=0, step=1, limit=4
    $region2: #{tpu_custom_call.1} parent=1 // loop_pre_header
      _
    $region3: #{tpu_custom_call.1} parent=1 // loop_header
      %s23 = sphi 0, %s27
      %p24 = scmp.ge.s32.totalorder %s23, 4
      %s33 = sphi 0, %s35
      %s36 = sphi 0, %s33
      %s37 = sphi 0, %s36
      %s53 = sphi 0, %s37
      %s59 = sphi 0, %s61
      %s62 = sphi 0, %s59
      %s63 = sphi 0, %s62
      %s79 = sphi 0, %s63
      %s85 = sphi 0, %s87
      %s88 = sphi 0, %s85
      %s89 = sphi 0, %s88
      %s105 = sphi 0, %s89
      %s109 = sphi 0, %s109
      %s111 = sphi 0, %s109
      %s112 = sphi 0, %s111
      %s126 = sphi 0, %s112
      %s130 = sphi 0, %s130
      %s132 = sphi 0, %s130
      %s133 = sphi 0, %s132
      %s147 = sphi 0, %s133
      %s151 = sphi 0, %s151
      %s153 = sphi 0, %s151
      %s154 = sphi 0, %s153
      %s168 = sphi 0, %s154
      %s172 = sphi 0, %s172
      %s174 = sphi 0, %s172
      %s175 = sphi 0, %s174
      %s189 = sphi 0, %s175
      %s195 = sphi 0, %s197
      %s198 = sphi 0, %s195
      %s199 = sphi 0, %s198
      %s215 = sphi 0, %s199
    $region4: #{tpu_custom_call.1} parent=1 // loop_header_branch
      %26 = sbr.rel (%p24) target = $region8
    $region5: #{tpu_custom_call.1} parent=1 // loop_body
      %s28 = ssub.s32 %s23, 1
      %s29 = ssub.s32 %s23, 2
      %s30 = sadd.s32 %s23, 1
      %s31 = ssub.s32 %s23, %s30
      %p32 = scmp.eq.s32.totalorder %s31, 0
      %s34 = sadd.s32 %s33, 1
      %s35 = scalar_select %p32, %s33, %s34
      %p38 = pneg %p32
      %p39 = scmp.eq.s32.totalorder %s23, 1
      %p40 = por %p38, %p39
      %p41 = scmp.ne.s32.totalorder %s33, %s36
      %p42 = scmp.eq.s32.totalorder %s23, 0
      %p43 = por %p41, %p42
      %p44 = scmp.ne.s32.totalorder %s33, %s36
      %p45 = scmp.eq.s32.totalorder %s28, 1
      %p46 = por %p44, %p45
      %p47 = scmp.ne.s32.totalorder %s36, %s37
      %p48 = scmp.eq.s32.totalorder %s28, 0
      %p49 = por %p47, %p48
      %p50 = scmp.ne.s32.totalorder %s36, %s37
      %p51 = scmp.eq.s32.totalorder %s29, 1
      %p52 = por %p50, %p51
      %p54 = scmp.ne.s32.totalorder %s37, %s53
      %p55 = scmp.eq.s32.totalorder %s29, 0
      %p56 = por %p54, %p55
      %s57 = ssub.s32 %s23, %s30
      %p58 = scmp.eq.s32.totalorder %s57, 0
      %s60 = sadd.s32 %s59, 1
      %s61 = scalar_select %p58, %s59, %s60
      %p64 = pneg %p58
      %p65 = scmp.eq.s32.totalorder %s23, 1
      %p66 = por %p64, %p65
      %p67 = scmp.ne.s32.totalorder %s59, %s62
      %p68 = scmp.eq.s32.totalorder %s23, 0
      %p69 = por %p67, %p68
      %p70 = scmp.ne.s32.totalorder %s59, %s62
      %p71 = scmp.eq.s32.totalorder %s28, 1
      %p72 = por %p70, %p71
      %p73 = scmp.ne.s32.totalorder %s62, %s63
      %p74 = scmp.eq.s32.totalorder %s28, 0
      %p75 = por %p73, %p74
      %p76 = scmp.ne.s32.totalorder %s62, %s63
      %p77 = scmp.eq.s32.totalorder %s29, 1
      %p78 = por %p76, %p77
      %p80 = scmp.ne.s32.totalorder %s63, %s79
      %p81 = scmp.eq.s32.totalorder %s29, 0
      %p82 = por %p80, %p81
      %s83 = ssub.s32 %s23, %s30
      %p84 = scmp.eq.s32.totalorder %s83, 0
      %s86 = sadd.s32 %s85, 1
      %s87 = scalar_select %p84, %s85, %s86
      %p90 = pneg %p84
      %p91 = scmp.eq.s32.totalorder %s23, 1
      %p92 = por %p90, %p91
      %p93 = scmp.ne.s32.totalorder %s85, %s88
      %p94 = scmp.eq.s32.totalorder %s23, 0
      %p95 = por %p93, %p94
      %p96 = scmp.ne.s32.totalorder %s85, %s88
      %p97 = scmp.eq.s32.totalorder %s28, 1
      %p98 = por %p96, %p97
      %p99 = scmp.ne.s32.totalorder %s88, %s89
      %p100 = scmp.eq.s32.totalorder %s28, 0
      %p101 = por %p99, %p100
      %p102 = scmp.ne.s32.totalorder %s88, %s89
      %p103 = scmp.eq.s32.totalorder %s29, 1
      %p104 = por %p102, %p103
      %p106 = scmp.ne.s32.totalorder %s89, %s105
      %p107 = scmp.eq.s32.totalorder %s29, 0
      %p108 = por %p106, %p107
      %s110 = sadd.s32 %s109, 1
      %p113 = scmp.eq.s32.totalorder %s23, 1
      %p114 = scmp.ne.s32.totalorder %s109, %s111
      %p115 = scmp.eq.s32.totalorder %s23, 0
      %p116 = por %p114, %p115
      %p117 = scmp.ne.s32.totalorder %s109, %s111
      %p118 = scmp.eq.s32.totalorder %s28, 1
      %p119 = por %p117, %p118
      %p120 = scmp.ne.s32.totalorder %s111, %s112
      %p121 = scmp.eq.s32.totalorder %s28, 0
      %p122 = por %p120, %p121
      %p123 = scmp.ne.s32.totalorder %s111, %s112
      %p124 = scmp.eq.s32.totalorder %s29, 1
      %p125 = por %p123, %p124
      %p127 = scmp.ne.s32.totalorder %s112, %s126
      %p128 = scmp.eq.s32.totalorder %s29, 0
      %p129 = por %p127, %p128
      %s131 = sadd.s32 %s130, 1
      %p134 = scmp.eq.s32.totalorder %s23, 1
      %p135 = scmp.ne.s32.totalorder %s130, %s132
      %p136 = scmp.eq.s32.totalorder %s23, 0
      %p137 = por %p135, %p136
      %p138 = scmp.ne.s32.totalorder %s130, %s132
      %p139 = scmp.eq.s32.totalorder %s28, 1
      %p140 = por %p138, %p139
      %p141 = scmp.ne.s32.totalorder %s132, %s133
      %p142 = scmp.eq.s32.totalorder %s28, 0
      %p143 = por %p141, %p142
      %p144 = scmp.ne.s32.totalorder %s132, %s133
      %p145 = scmp.eq.s32.totalorder %s29, 1
      %p146 = por %p144, %p145
      %p148 = scmp.ne.s32.totalorder %s133, %s147
      %p149 = scmp.eq.s32.totalorder %s29, 0
      %p150 = por %p148, %p149
      %s152 = sadd.s32 %s151, 1
      %p155 = scmp.eq.s32.totalorder %s23, 1
      %p156 = scmp.ne.s32.totalorder %s151, %s153
      %p157 = scmp.eq.s32.totalorder %s23, 0
      %p158 = por %p156, %p157
      %p159 = scmp.ne.s32.totalorder %s151, %s153
      %p160 = scmp.eq.s32.totalorder %s28, 1
      %p161 = por %p159, %p160
      %p162 = scmp.ne.s32.totalorder %s153, %s154
      %p163 = scmp.eq.s32.totalorder %s28, 0
      %p164 = por %p162, %p163
      %p165 = scmp.ne.s32.totalorder %s153, %s154
      %p166 = scmp.eq.s32.totalorder %s29, 1
      %p167 = por %p165, %p166
      %p169 = scmp.ne.s32.totalorder %s154, %s168
      %p170 = scmp.eq.s32.totalorder %s29, 0
      %p171 = por %p169, %p170
      %s173 = sadd.s32 %s172, 1
      %p176 = scmp.eq.s32.totalorder %s23, 1
      %p177 = scmp.ne.s32.totalorder %s172, %s174
      %p178 = scmp.eq.s32.totalorder %s23, 0
      %p179 = por %p177, %p178
      %p180 = scmp.ne.s32.totalorder %s172, %s174
      %p181 = scmp.eq.s32.totalorder %s28, 1
      %p182 = por %p180, %p181
      %p183 = scmp.ne.s32.totalorder %s174, %s175
      %p184 = scmp.eq.s32.totalorder %s28, 0
      %p185 = por %p183, %p184
      %p186 = scmp.ne.s32.totalorder %s174, %s175
      %p187 = scmp.eq.s32.totalorder %s29, 1
      %p188 = por %p186, %p187
      %p190 = scmp.ne.s32.totalorder %s175, %s189
      %p191 = scmp.eq.s32.totalorder %s29, 0
      %p192 = por %p190, %p191
      %s193 = ssub.s32 %s23, %s30
      %p194 = scmp.eq.s32.totalorder %s193, 0
      %s196 = sadd.s32 %s195, 1
      %s197 = scalar_select %p194, %s195, %s196
      %p200 = pneg %p194
      %p201 = scmp.eq.s32.totalorder %s23, 1
      %p202 = por %p200, %p201
      %p203 = scmp.ne.s32.totalorder %s195, %s198
      %p204 = scmp.eq.s32.totalorder %s23, 0
      %p205 = por %p203, %p204
      %p206 = scmp.ne.s32.totalorder %s195, %s198
      %p207 = scmp.eq.s32.totalorder %s28, 1
      %p208 = por %p206, %p207
      %p209 = scmp.ne.s32.totalorder %s198, %s199
      %p210 = scmp.eq.s32.totalorder %s28, 0
      %p211 = por %p209, %p210
      %p212 = scmp.ne.s32.totalorder %s198, %s199
      %p213 = scmp.eq.s32.totalorder %s29, 1
      %p214 = por %p212, %p213
      %p216 = scmp.ne.s32.totalorder %s199, %s215
      %p217 = scmp.eq.s32.totalorder %s29, 0
      %p218 = por %p216, %p217
      %p219 = scmp.le.s32.totalorder 1, %s23
      %p220 = scmp.lt.s32.totalorder %s23, 3
      %p221 = pnand %p219, %p220
      %p222 = pneg %p221
      // Predicated region
      $region9: #{tpu_custom_call.1} parent=5 // pred_check
        _
      $region10: #{tpu_custom_call.1} parent=5 // pred_check_branch
        %224 = sbr.rel (%p221) target = $region12
      $region11: #{tpu_custom_call.1} parent=5 // pred_region
        %s225 = ssub.s32 %s23, 1
        // Predicated region
        $region13: #{tpu_custom_call.1} parent=11 // pred_check
          %p226 = pneg %p122
        $region14: #{tpu_custom_call.1} parent=11 // pred_check_branch
          %228 = sbr.rel (%p226) target = $region16
        $region15: #{tpu_custom_call.1} parent=11 // pred_region
          %s230 = ssub.s32 128, 128
          %231 = vsyncadd [#allocation9], %s230
          %s233 = sshll.u32 [#allocation8], 4
          %s234 = int_to_ptr.vmem [resolvable:$true] %s233
          %236 = dma.hbm_to_vmem [thread:$0]  %s3, 128, %s234, [#allocation9]
        $region16: #{tpu_custom_call.1} parent=11 // pred_fallthru
          _
        // Predicated region
        $region17: #{tpu_custom_call.1} parent=11 // pred_check
          %p237 = pneg %p143
        $region18: #{tpu_custom_call.1} parent=11 // pred_check_branch
          %239 = sbr.rel (%p237) target = $region20
        $region19: #{tpu_custom_call.1} parent=11 // pred_region
          _
        $region20: #{tpu_custom_call.1} parent=11 // pred_fallthru
          _
        // Predicated region
        $region21: #{tpu_custom_call.1} parent=11 // pred_check
          %p240 = pneg %p164
        $region22: #{tpu_custom_call.1} parent=11 // pred_check_branch
          %242 = sbr.rel (%p240) target = $region24
        $region23: #{tpu_custom_call.1} parent=11 // pred_region
          _
        $region24: #{tpu_custom_call.1} parent=11 // pred_fallthru
          _
        // Predicated region
        $region25: #{tpu_custom_call.1} parent=11 // pred_check
          %p243 = pneg %p185
        $region26: #{tpu_custom_call.1} parent=11 // pred_check_branch
          %245 = sbr.rel (%p243) target = $region28
        $region27: #{tpu_custom_call.1} parent=11 // pred_region
          _
        $region28: #{tpu_custom_call.1} parent=11 // pred_fallthru
          _
      $region12: #{tpu_custom_call.1} parent=5 // pred_fallthru
        _
      %p246 = scmp.lt.s32.totalorder %s23, 2
      // Predicated region
      $region29: #{tpu_custom_call.1} parent=5 // pred_check
        %p247 = pneg %p246
      $region30: #{tpu_custom_call.1} parent=5 // pred_check_branch
        %249 = sbr.rel (%p247) target = $region32
      $region31: #{tpu_custom_call.1} parent=5 // pred_region
        // Predicated region
        $region33: #{tpu_custom_call.1} parent=31 // pred_check
          %p250 = pneg %p43
        $region34: #{tpu_custom_call.1} parent=31 // pred_check_branch
          %252 = sbr.rel (%p250) target = $region36
        $region35: #{tpu_custom_call.1} parent=31 // pred_region
          %s253 = sand.u32 %s33, 1
          %s254 = scalar_lea.sflag [#allocation3], %s253
          %s255 = sand.u32 %s33, 1
          %s256 = smul.addr %s255, 8
          %s257 = scalar_lea.vmem [#allocation2], %s256
          %s259 = ssub.s32 128, 128
          %260 = vsyncadd %s254, %s259
          %s261 = smul.addr %s23, 128
          %s262 = scalar_lea.hbm %s0, %s261
          %s264 = sshll.u32 %s257, 4
          %s265 = int_to_ptr.vmem [resolvable:$true] %s264
          %267 = dma.hbm_to_vmem [thread:$0]  %s262, 128, %s265, %s254
        $region36: #{tpu_custom_call.1} parent=31 // pred_fallthru
          _
        // Predicated region
        $region37: #{tpu_custom_call.1} parent=31 // pred_check
          %p268 = pneg %p69
        $region38: #{tpu_custom_call.1} parent=31 // pred_check_branch
          %270 = sbr.rel (%p268) target = $region40
        $region39: #{tpu_custom_call.1} parent=31 // pred_region
          %s271 = sand.u32 %s23, 1
          %s272 = scalar_lea.sflag [#allocation6], %s271
          %s273 = sand.u32 %s59, 1
          %s274 = smul.addr %s273, 8
          %s275 = scalar_lea.vmem [#allocation5], %s274
          %s277 = ssub.s32 128, 128
          %278 = vsyncadd %s272, %s277
          %s279 = smul.addr %s23, 128
          %s280 = scalar_lea.hbm %s1, %s279
          %s282 = sshll.u32 %s275, 4
          %s283 = int_to_ptr.vmem [resolvable:$true] %s282
          %285 = dma.hbm_to_vmem [thread:$0]  %s280, 128, %s283, %s272
        $region40: #{tpu_custom_call.1} parent=31 // pred_fallthru
          _
        // Predicated region
        $region41: #{tpu_custom_call.1} parent=31 // pred_check
          %p286 = pneg %p95
        $region42: #{tpu_custom_call.1} parent=31 // pred_check_branch
          %288 = sbr.rel (%p286) target = $region44
        $region43: #{tpu_custom_call.1} parent=31 // pred_region
          %s289 = sand.u32 %s23, 1
          %s290 = scalar_lea.sflag [#allocation6], %s289
          %s291 = sand.u32 %s85, 1
          %s292 = smul.addr %s291, 8
          %s293 = scalar_lea.vmem [#allocation7], %s292
          %s295 = ssub.s32 128, 128
          %296 = vsyncadd %s290, %s295
          %s297 = smul.addr %s23, 128
          %s298 = scalar_lea.hbm %s2, %s297
          %s300 = sshll.u32 %s293, 4
          %s301 = int_to_ptr.vmem [resolvable:$true] %s300
          %303 = dma.hbm_to_vmem [thread:$0]  %s298, 128, %s301, %s290
        $region44: #{tpu_custom_call.1} parent=31 // pred_fallthru
          _
      $region32: #{tpu_custom_call.1} parent=5 // pred_fallthru
        _
      %p304 = scmp.le.s32.totalorder 1, %s23
      %p305 = scmp.lt.s32.totalorder %s23, 3
      %p306 = pnand %p304, %p305
      %p307 = pneg %p306
      // Predicated region
      $region45: #{tpu_custom_call.1} parent=5 // pred_check
        _
      $region46: #{tpu_custom_call.1} parent=5 // pred_check_branch
        %309 = sbr.rel (%p306) target = $region48
      $region47: #{tpu_custom_call.1} parent=5 // pred_region
        %s310 = ssub.s32 %s23, 1
        %s311 = sand.u32 %s36, 1
        %s312 = scalar_lea.sflag [#allocation3], %s311
        %s313 = sand.u32 %s36, 1
        %s314 = smul.addr %s313, 8
        %s315 = scalar_lea.vmem [#allocation2], %s314
        // Predicated region
        $region49: #{tpu_custom_call.1} parent=47 // pred_check
          %p316 = pneg %p49
        $region50: #{tpu_custom_call.1} parent=47 // pred_check_branch
          %318 = sbr.rel (%p316) target = $region52
        $region51: #{tpu_custom_call.1} parent=47 // pred_region
          %319 = dma.done %s312, 128
        $region52: #{tpu_custom_call.1} parent=47 // pred_fallthru
          _
        %s320 = sand.u32 %s28, 1
        %s321 = scalar_lea.sflag [#allocation6], %s320
        %s322 = sand.u32 %s62, 1
        %s323 = smul.addr %s322, 8
        %s324 = scalar_lea.vmem [#allocation5], %s323
        // Predicated region
        $region53: #{tpu_custom_call.1} parent=47 // pred_check
          %p325 = pneg %p75
        $region54: #{tpu_custom_call.1} parent=47 // pred_check_branch
          %327 = sbr.rel (%p325) target = $region56
        $region55: #{tpu_custom_call.1} parent=47 // pred_region
          %328 = dma.done %s321, 128
        $region56: #{tpu_custom_call.1} parent=47 // pred_fallthru
          _
        %s329 = sand.u32 %s28, 1
        %s330 = scalar_lea.sflag [#allocation6], %s329
        %s331 = sand.u32 %s88, 1
        %s332 = smul.addr %s331, 8
        %s333 = scalar_lea.vmem [#allocation7], %s332
        // Predicated region
        $region57: #{tpu_custom_call.1} parent=47 // pred_check
          %p334 = pneg %p101
        $region58: #{tpu_custom_call.1} parent=47 // pred_check_branch
          %336 = sbr.rel (%p334) target = $region60
        $region59: #{tpu_custom_call.1} parent=47 // pred_region
          %337 = dma.done %s330, 128
        $region60: #{tpu_custom_call.1} parent=47 // pred_fallthru
          _
        // Predicated region
        $region61: #{tpu_custom_call.1} parent=47 // pred_check
          %p338 = pneg %p122
        $region62: #{tpu_custom_call.1} parent=47 // pred_check_branch
          %340 = sbr.rel (%p338) target = $region64
        $region63: #{tpu_custom_call.1} parent=47 // pred_region
          %341 = dma.done [#allocation9], 128
        $region64: #{tpu_custom_call.1} parent=47 // pred_fallthru
          _
        %s342 = sand.u32 %s36, 1
        %s343 = scalar_lea.sflag [#allocation3], %s342
        %s344 = sand.u32 %s36, 1
        %s345 = smul.addr %s344, 8
        %s346 = scalar_lea.vmem [#allocation2], %s345
        %p347 = pneg %p49
        %p348 = pneg %p46
        %s349 = sand.u32 %s28, 1
        %s350 = scalar_lea.sflag [#allocation6], %s349
        %s351 = sand.u32 %s62, 1
        %s352 = smul.addr %s351, 8
        %s353 = scalar_lea.vmem [#allocation5], %s352
        %p354 = pneg %p75
        %p355 = pneg %p72
        %s356 = sand.u32 %s28, 1
        %s357 = scalar_lea.sflag [#allocation6], %s356
        %s358 = sand.u32 %s88, 1
        %s359 = smul.addr %s358, 8
        %s360 = scalar_lea.vmem [#allocation7], %s359
        %p361 = pneg %p101
        %p362 = pneg %p98
        %p363 = pneg %p122
        %p364 = pneg %p119
        %p365 = pneg %p143
        %p366 = pneg %p140
        %p367 = pneg %p164
        %p368 = pneg %p161
        %p369 = pneg %p185
        %p370 = pneg %p182
        %p371 = pneg %p211
        %p372 = pneg %p208
        %s373 = sand.u32 %s198, 1
        %s374 = scalar_lea.sflag [#allocation4], %s373
        %s375 = sand.u32 %s198, 1
        %s376 = smul.addr %s375, 8
        %s377 = scalar_lea.vmem [#allocation10], %s376
        %v378 = vld [vmem:[%s315] sm:$0xff]
        %v379 = vld [vmem:[%s324] sm:$0xff]
        %v380 = vadd.f32 %v378, %v379
        %v381 = vld [vmem:[#allocation8] sm:$0xff]
        %v382 = vadd.f32 %v380, %v381
        %v383 = vld [vmem:[%s333] sm:$0xff]
        %v384 = vadd.f32 %v382, %v383
        %v385 = vadd.f32 %v384, %v381
        %v386 = vld [vmem:[%s4] sm:$0x1]
        %v388 = vlaneseq
        %v389 = vshrl.u32 %v388, 7
        %v390 = vsub.s32 0, %v389
        %v391 = vrot.slane %v386, %v390
        %v393 = vadd.f32 %v385, %v391
        %v394 = vld [vmem:[%s5] sm:$0x1]
        %v395 = vld [vmem:[%s6] sm:$0x1]
        %vm396 = vcmask 261120
        %v397 = vsel %vm396, %v393, 0.0
        %398 = vadd.xlane.f32.xlu0 %v397
        %v399 = vpop.xlane.xlu0 %398
        %v400 = vrcp.pop 32.0
        %v401 = vmul.f32 %v399, %v400
        %v402 = vsub.f32 %v393, %v401
        %v403 = vmul.f32 %v402, %v402
        %v404 = vsel %vm396, %v403, 0.0
        %405 = vadd.xlane.f32.xlu0 %v404
        %v406 = vpop.xlane.xlu0 %405
        %v407 = vmul.f32 %v406, %v400
        %v408 = vadd.f32 %v407, 1e-12
        %v409 = vrsqrt.pop %v408
        %v410 = vmul.f32 %v402, %v409
        %v412 = vlaneseq
        %v413 = vshrl.u32 %v412, 7
        %v414 = vsub.s32 0, %v413
        %v415 = vrot.slane %v394, %v414
        %v417 = vmul.f32 %v410, %v415
        %v419 = vlaneseq
        %v420 = vshrl.u32 %v419, 7
        %v421 = vsub.s32 0, %v420
        %v422 = vrot.slane %v395, %v421
        %v424 = vadd.f32 %v417, %v422
        %425 = vst.msk [vmem:[%s377] sm:$0xff] %vm396, %v424
        %s426 = sand.u32 %s198, 1
        %s427 = scalar_lea.sflag [#allocation4], %s426
        %s428 = sand.u32 %s198, 1
        %s429 = smul.addr %s428, 8
        %s430 = scalar_lea.vmem [#allocation10], %s429
        // Predicated region
        $region65: #{tpu_custom_call.1} parent=47 // pred_check
          %p431 = pneg %p208
        $region66: #{tpu_custom_call.1} parent=47 // pred_check_branch
          %433 = sbr.rel (%p431) target = $region68
        $region67: #{tpu_custom_call.1} parent=47 // pred_region
          %s435 = ssub.s32 128, 128
          %436 = vsyncadd %s427, %s435
          %s437 = smul.addr %s28, 128
          %s438 = scalar_lea.hbm %s7, %s437
          %s440 = sshll.u32 %s430, 4
          %s441 = int_to_ptr.vmem [resolvable:$true] %s440
          %443 = dma.vmem_to_hbm [thread:$0]  %s441, 128, %s438, %s427
        $region68: #{tpu_custom_call.1} parent=47 // pred_fallthru
          _
      $region48: #{tpu_custom_call.1} parent=5 // pred_fallthru
        _
      %p444 = scmp.le.s32.totalorder 2, %s23
      // Predicated region
      $region69: #{tpu_custom_call.1} parent=5 // pred_check
        %p445 = pneg %p444
      $region70: #{tpu_custom_call.1} parent=5 // pred_check_branch
        %447 = sbr.rel (%p445) target = $region72
      $region71: #{tpu_custom_call.1} parent=5 // pred_region
        %s448 = ssub.s32 %s23, 2
        // Predicated region
        $region73: #{tpu_custom_call.1} parent=71 // pred_check
          %p449 = pneg %p214
        $region74: #{tpu_custom_call.1} parent=71 // pred_check_branch
          %451 = sbr.rel (%p449) target = $region76
        $region75: #{tpu_custom_call.1} parent=71 // pred_region
          %s452 = sand.u32 %s199, 1
          %s453 = scalar_lea.sflag [#allocation4], %s452
          %s454 = sand.u32 %s199, 1
          %s455 = smul.addr %s454, 8
          %s456 = scalar_lea.vmem [#allocation10], %s455
          %457 = dma.done %s453, 128
        $region76: #{tpu_custom_call.1} parent=71 // pred_fallthru
          _
      $region72: #{tpu_custom_call.1} parent=5 // pred_fallthru
        _
    $region6: #{tpu_custom_call.1} parent=1 // loop_footer
      %s27 = sadd.s32 1, %s23
    $region7: #{tpu_custom_call.1} parent=1 // loop_footer_branch
      %22 = sbr.rel target = $region3
    $region8: #{tpu_custom_call.1} parent=1 // loop_exit
      _
    %458 = vsyncpa [#allocation3], 1
    %s459 = scalar_lea.sflag [#allocation3], 1
    %460 = vsyncpa %s459, 1
    %461 = vsyncpa [#allocation6], 1
    %s462 = scalar_lea.sflag [#allocation6], 1
    %463 = vsyncpa %s462, 1
    %464 = vsyncpa [#allocation9], 1
    %465 = vsyncpa [#allocation4], 1
    %s466 = scalar_lea.sflag [#allocation4], 1
    %467 = vsyncpa %s466, 1

</llo_original>
